<compile_context>
chip_gen: v7x
topology: tpu7x:2x2x1
jax: 0.10.0
libtpu: 0.0.40
codegen_flags: <defaults>
</compile_context>

<pallas_src>
import functools

import jax
import jax.numpy as jnp
from jax.experimental import pallas as pl
from jax.experimental.pallas import tpu as pltpu

# ---- synthetic "opts" (small shapes) ----------------------------------------
MIN_AGE = 16
MAX_AGE = 32
OUTPUT_SIZE = MAX_AGE - MIN_AGE      # opts.cls_type == 'oh'
CNN_FEAT = 128                       # stand-in for resnet18's 512-d feature
AGE_FC = 32                          # opts.age_fc_size
KH = KW = 3
CIN = 3
K_RAW = KH * KW * CIN                # 27
K_PAD = 32                           # pad contraction dim for clean (8,128) tiling
ROW_TILE = 2048                      # im2col rows per grid step (fits v7x VMEM easily)


def _round_up(x, m):
    return (x + m - 1) // m * m


def _stable_sigmoid(x):
    # numerically stable sigmoid, f32 on the VPU/EUP
    z = jnp.exp(-jnp.abs(x))
    return jnp.where(x >= 0, 1.0 / (1.0 + z), z / (1.0 + z))


# ---- Pallas kernel: conv tile matmul + pooled-sum accumulator + age_cls head --
def _gan_forward_kernel(patches_ref, wc_ref, w0_ref, b0_ref, w1_ref, b1_ref,
                        feat_ref, fc_ref, acc_ref, *, inv_hw):
    t = pl.program_id(1)

    @pl.when(t == 0)
    def _init():
        acc_ref[...] = jnp.zeros_like(acc_ref)

    # conv as an MXU matmul over one bf16 im2col tile, ReLU, then row-sum into
    # the per-batch pooled accumulator (replaces the old pool-matrix matmul).
    conv = jnp.dot(patches_ref[0], wc_ref[...],
                   preferred_element_type=jnp.float32)          # (T, F) f32
    conv = jnp.maximum(conv, 0.0)
    acc_ref[...] += jnp.sum(conv, axis=0, keepdims=True)        # (1, F)

    @pl.when(t == pl.num_programs(1) - 1)
    def _finalize():
        feat = acc_ref[...] * inv_hw                            # GAP: scale once
        feat_ref[0] = feat

        # age_cls: fc0 (+bias) -> ReLU -> dropout(identity, eval) -> cls (+bias)
        h = jnp.dot(feat.astype(jnp.bfloat16), w0_ref[...],
                    preferred_element_type=jnp.float32) + b0_ref[...]
        h = jnp.maximum(h, 0.0)
        logits = jnp.dot(h.astype(jnp.bfloat16), w1_ref[...],
                         preferred_element_type=jnp.float32) + b1_ref[...]

        # cls_type == 'oh': fc_out = sigmoid(logits)
        fc_ref[0] = _stable_sigmoid(logits)


# ---- wrapper ----------------------------------------------------------------
def gan_model_forward(img_nchw, params):
    """img_nchw: (B, 3, H, W) float32.  Returns (age_out (B,), fc_out (B, OUT), feat (B, F))."""
    B, C, H, W = img_nchw.shape
    assert C == CIN
    HW = H * W

    # glue: NCHW -> NHWC, pad, im2col (kh-major, kw, cin-minor ordering)
    x = jnp.transpose(img_nchw, (0, 2, 3, 1)).astype(jnp.float32)
    xpad = jnp.pad(x, ((0, 0), (1, 1), (1, 1), (0, 0)))
    taps = [xpad[:, kh:kh + H, kw:kw + W, :] for kh in range(KH) for kw in range(KW)]
    patches = jnp.concatenate(taps, axis=-1).reshape(B, HW, K_RAW)

    # row tile (multiple of 8); pad rows with zeros (zero rows add 0 to the pool)
    T = min(ROW_TILE, _round_up(HW, 8))
    HW_pad = _round_up(HW, T)
    n_tiles = HW_pad // T
    patches = jnp.pad(patches, ((0, 0), (0, HW_pad - HW), (0, K_PAD - K_RAW)))
    patches = patches.astype(jnp.bfloat16)                      # bf16 MXU feed

    wc = jnp.pad(params["conv_w"].reshape(K_RAW, CNN_FEAT),
                 ((0, K_PAD - K_RAW), (0, 0))).astype(jnp.bfloat16)
    w0 = params["fc0_w"].astype(jnp.bfloat16)
    b0 = params["fc0_b"].reshape(1, AGE_FC).astype(jnp.float32)
    w1 = params["cls_w"].astype(jnp.bfloat16)
    b1 = params["cls_b"].reshape(1, OUTPUT_SIZE).astype(jnp.float32)

    kernel = functools.partial(_gan_forward_kernel, inv_hw=1.0 / HW)

    in_specs = [
        pl.BlockSpec((1, T, K_PAD), lambda b, t: (b, t, 0)),             # patches tile
        pl.BlockSpec((K_PAD, CNN_FEAT), lambda b, t: (0, 0)),            # conv_w
        pl.BlockSpec((CNN_FEAT, AGE_FC), lambda b, t: (0, 0)),           # fc0_w
        pl.BlockSpec((1, AGE_FC), lambda b, t: (0, 0)),                  # fc0_b
        pl.BlockSpec((AGE_FC, OUTPUT_SIZE), lambda b, t: (0, 0)),        # cls_w
        pl.BlockSpec((1, OUTPUT_SIZE), lambda b, t: (0, 0)),             # cls_b
    ]
    out_shape = (
        jax.ShapeDtypeStruct((B, 1, CNN_FEAT), jnp.float32),             # feat
        jax.ShapeDtypeStruct((B, 1, OUTPUT_SIZE), jnp.float32),          # fc_out
    )
    out_specs = (
        pl.BlockSpec((1, 1, CNN_FEAT), lambda b, t: (b, 0, 0)),
        pl.BlockSpec((1, 1, OUTPUT_SIZE), lambda b, t: (b, 0, 0)),
    )

    feat3, fc3 = pl.pallas_call(
        kernel,
        out_shape=out_shape,
        grid_spec=pltpu.PrefetchScalarGridSpec(
            num_scalar_prefetch=0,
            grid=(B, n_tiles),                                    # reduction axis last
            in_specs=in_specs,
            out_specs=out_specs,
            scratch_shapes=[pltpu.VMEM((1, CNN_FEAT), jnp.float32)],  # pooled-sum acc
        ),
        compiler_params=pltpu.CompilerParams(
            dimension_semantics=("parallel", "arbitrary"),        # batch shards on v7x
            vmem_limit_bytes=32 * 1024 * 1024,                    # safe on v5e/v6e/v7x
        ),
    )(patches, wc, w0, b0, w1, b1)

    feat = feat3.reshape(B, CNN_FEAT)
    fc = fc3.reshape(B, OUTPUT_SIZE)
    # 'oh' age decoding done in the wrapper (keeps a lane-width-1 store out of the kernel)
    age = jnp.sum(fc, axis=1) + jnp.float32(MIN_AGE)
    return age, fc, feat


# ---- deterministic parameter init (weights_init semantics) -------------------
def init_params(key):
    k_conv, k0, k1 = jax.random.split(key, 3)
    return {
        # Conv* : normal(0, 0.02); Linear: normal(0, 0.02), bias 0
        "conv_w": 0.02 * jax.random.normal(k_conv, (KH, KW, CIN, CNN_FEAT), jnp.float32),
        "fc0_w": 0.02 * jax.random.normal(k0, (CNN_FEAT, AGE_FC), jnp.float32),
        "fc0_b": jnp.zeros((AGE_FC,), jnp.float32),
        "cls_w": 0.02 * jax.random.normal(k1, (AGE_FC, OUTPUT_SIZE), jnp.float32),
        "cls_b": jnp.zeros((OUTPUT_SIZE,), jnp.float32),
    }


# ---- plain-JAX reference for verification ------------------------------------
def reference_forward(img_nchw, params):
    x = jnp.transpose(img_nchw, (0, 2, 3, 1)).astype(jnp.float32)
    conv = jax.lax.conv_general_dilated(
        x, params["conv_w"], window_strides=(1, 1), padding="SAME",
        dimension_numbers=("NHWC", "HWIO", "NHWC"))
    feat = jnp.mean(jnp.maximum(conv, 0.0), axis=(1, 2))                  # (B, F)
    h = jnp.maximum(feat @ params["fc0_w"] + params["fc0_b"], 0.0)
    logits = h @ params["cls_w"] + params["cls_b"]
    fc = jax.nn.sigmoid(logits)
    age = jnp.sum(fc, axis=1) + MIN_AGE
    return age, fc, feat


if __name__ == "__main__":
    key = jax.random.PRNGKey(0)
    k_img, k_params = jax.random.split(key)

    B, H, W = 2, 16, 16
    img = jax.random.normal(k_img, (B, CIN, H, W), jnp.float32)   # NCHW, like PyTorch
    params = init_params(k_params)

    age_out, fc_out, feat = gan_model_forward(img, params)
    jax.block_until_ready((age_out, fc_out, feat))

    age_ref, fc_ref, feat_ref = reference_forward(img, params)
    assert age_out.shape == (B,) and fc_out.shape == (B, OUTPUT_SIZE) and feat.shape == (B, CNN_FEAT)
    # bf16 MXU operands with f32 accumulation -> small tolerance vs the f32 reference
    assert jnp.allclose(feat, feat_ref, atol=2e-3)
    assert jnp.allclose(fc_out, fc_ref, atol=2e-3)
    assert jnp.allclose(age_out, age_ref, atol=1e-2)

    print("KERNEL_OK")
</pallas_src>

<mosaic_0001>
module attributes {stable_mosaic.version = 11 : i64} {
  func.func @_gan_forward_kernel(%arg0: i32, %arg1: i32, %arg2: memref<1x256x32xbf16, #tpu.memory_space<vmem>>, %arg3: memref<32x128xbf16, #tpu.memory_space<vmem>>, %arg4: memref<128x32xbf16, #tpu.memory_space<vmem>>, %arg5: memref<1x32xf32, #tpu.memory_space<vmem>>, %arg6: memref<32x16xbf16, #tpu.memory_space<vmem>>, %arg7: memref<1x16xf32, #tpu.memory_space<vmem>>, %arg8: memref<1x1x128xf32, #tpu.memory_space<vmem>>, %arg9: memref<1x1x16xf32, #tpu.memory_space<vmem>>, %arg10: memref<1x128xf32, #tpu.memory_space<vmem>>) attributes {dimension_semantics = [#tpu.dimension_semantics<parallel>, #tpu.dimension_semantics<arbitrary>], iteration_bounds = array<i64: 2, 1>, scalar_prefetch = 0 : i64, scratch_operands = 1 : i64, tpu.core_type = #tpu.core_type<tc>, window_params = [{transform_indices = @transform_0, window_bounds = array<i64: 1, 256, 32>}, {pipeline_mode = #tpu.pipeline_mode<synchronous>, transform_indices = @transform_1, window_bounds = array<i64: 32, 128>}, {pipeline_mode = #tpu.pipeline_mode<synchronous>, transform_indices = @transform_2, window_bounds = array<i64: 128, 32>}, {pipeline_mode = #tpu.pipeline_mode<synchronous>, transform_indices = @transform_3, window_bounds = array<i64: 1, 32>}, {pipeline_mode = #tpu.pipeline_mode<synchronous>, transform_indices = @transform_4, window_bounds = array<i64: 32, 16>}, {pipeline_mode = #tpu.pipeline_mode<synchronous>, transform_indices = @transform_5, window_bounds = array<i64: 1, 16>}, {transform_indices = @transform_6, window_bounds = array<i64: 1, 1, 128>}, {transform_indices = @transform_7, window_bounds = array<i64: 1, 1, 16>}]} {
    %c0_i32 = arith.constant 0 : i32
    %0 = arith.cmpi eq, %arg1, %c0_i32 : i32
    %1 = arith.extui %0 : i1 to i32
    %c0_i32_0 = arith.constant 0 : i32
    %2 = arith.cmpi ne, %1, %c0_i32_0 : i32
    scf.if %2 {
      %cst_13 = arith.constant 0.000000e+00 : f32
      %17 = vector.broadcast %cst_13 : f32 to vector<1x128xf32>
      %c0_14 = arith.constant 0 : index
      %c0_15 = arith.constant 0 : index
      %18 = vector.load %arg10[%c0_14, %c0_15] : memref<1x128xf32, #tpu.memory_space<vmem>>, vector<1x128xf32>
      tpu.vector_store %arg10[%c0_14, %c0_15], %17 {strides = array<i32>} : memref<1x128xf32, #tpu.memory_space<vmem>>, vector<1x128xf32>,
    } else {
    }
    %c0 = arith.constant 0 : index
    %c0_1 = arith.constant 0 : index
    %c0_2 = arith.constant 0 : index
    %3 = vector.load %arg2[%c0, %c0_1, %c0_2] : memref<1x256x32xbf16, #tpu.memory_space<vmem>>, vector<1x256x32xbf16>
    %4 = vector.shape_cast %3 : vector<1x256x32xbf16> to vector<256x32xbf16>
    %c0_3 = arith.constant 0 : index
    %c0_4 = arith.constant 0 : index
    %5 = vector.load %arg3[%c0_3, %c0_4] : memref<32x128xbf16, #tpu.memory_space<vmem>>, vector<32x128xbf16>
    %cst = arith.constant dense<0.000000e+00> : vector<256x128xf32>
    %6 = tpu.matmul %4, %5, %cst {dimension_numbers = #tpu.dot_dimension_numbers<[1], [0], [0], [1], [0, 0, 1, 1], [], []>} : vector<256x32xbf16>, vector<32x128xbf16>, vector<256x128xf32> -> vector<256x128xf32>
    %cst_5 = arith.constant 0.000000e+00 : f32
    %7 = vector.broadcast %cst_5 : f32 to vector<256x128xf32>
    %8 = arith.maximumf %6, %7 : vector<256x128xf32>
    %c0_6 = arith.constant 0 : index
    %c0_7 = arith.constant 0 : index
    %9 = vector.load %arg10[%c0_6, %c0_7] : memref<1x128xf32, #tpu.memory_space<vmem>>, vector<1x128xf32>
    %cst_8 = arith.constant dense<0.000000e+00> : vector<128xf32>
    %10 = vector.multi_reduction <add>, %8, %cst_8 [0] : vector<256x128xf32> to vector<128xf32>
    %11 = vector.shape_cast %10 : vector<128xf32> to vector<1x128xf32>
    %12 = arith.addf %9, %11 : vector<1x128xf32>
    %c0_9 = arith.constant 0 : index
    %c0_10 = arith.constant 0 : index
    %13 = vector.load %arg10[%c0_9, %c0_10] : memref<1x128xf32, #tpu.memory_space<vmem>>, vector<1x128xf32>
    tpu.vector_store %arg10[%c0_9, %c0_10], %12 {strides = array<i32>} : memref<1x128xf32, #tpu.memory_space<vmem>>, vector<1x128xf32>,
    %c0_i32_11 = arith.constant 0 : i32
    %14 = arith.cmpi eq, %arg1, %c0_i32_11 : i32
    %15 = arith.extui %14 : i1 to i32
    %c0_i32_12 = arith.constant 0 : i32
    %16 = arith.cmpi ne, %15, %c0_i32_12 : i32
    scf.if %16 {
      %c0_13 = arith.constant 0 : index
      %c0_14 = arith.constant 0 : index
      %17 = vector.load %arg10[%c0_13, %c0_14] : memref<1x128xf32, #tpu.memory_space<vmem>>, vector<1x128xf32>
      %cst_15 = arith.constant 3.906250e-03 : f32
      %18 = vector.broadcast %cst_15 : f32 to vector<1x128xf32>
      %19 = arith.mulf %17, %18 : vector<1x128xf32>
      %c0_16 = arith.constant 0 : index
      %c0_17 = arith.constant 0 : index
      %c0_18 = arith.constant 0 : index
      %20 = vector.load %arg8[%c0_16, %c0_17, %c0_18] : memref<1x1x128xf32, #tpu.memory_space<vmem>>, vector<1x1x128xf32>
      %21 = vector.shape_cast %20 : vector<1x1x128xf32> to vector<1x128xf32>
      %22 = vector.shape_cast %19 : vector<1x128xf32> to vector<1x1x128xf32>
      tpu.vector_store %arg8[%c0_16, %c0_17, %c0_18], %22 {strides = array<i32>} : memref<1x1x128xf32, #tpu.memory_space<vmem>>, vector<1x1x128xf32>,
      %23 = arith.truncf %19 : vector<1x128xf32> to vector<1x128xbf16>
      %c0_19 = arith.constant 0 : index
      %c0_20 = arith.constant 0 : index
      %24 = vector.load %arg4[%c0_19, %c0_20] : memref<128x32xbf16, #tpu.memory_space<vmem>>, vector<128x32xbf16>
      %cst_21 = arith.constant dense<0.000000e+00> : vector<1x32xf32>
      %25 = tpu.matmul %23, %24, %cst_21 {dimension_numbers = #tpu.dot_dimension_numbers<[1], [0], [0], [1], [0, 0, 1, 1], [], []>} : vector<1x128xbf16>, vector<128x32xbf16>, vector<1x32xf32> -> vector<1x32xf32>
      %c0_22 = arith.constant 0 : index
      %c0_23 = arith.constant 0 : index
      %26 = vector.load %arg5[%c0_22, %c0_23] : memref<1x32xf32, #tpu.memory_space<vmem>>, vector<1x32xf32>
      %27 = arith.addf %25, %26 : vector<1x32xf32>
      %cst_24 = arith.constant 0.000000e+00 : f32
      %28 = vector.broadcast %cst_24 : f32 to vector<1x32xf32>
      %29 = arith.maximumf %27, %28 : vector<1x32xf32>
      %30 = arith.truncf %29 : vector<1x32xf32> to vector<1x32xbf16>
      %c0_25 = arith.constant 0 : index
      %c0_26 = arith.constant 0 : index
      %31 = vector.load %arg6[%c0_25, %c0_26] : memref<32x16xbf16, #tpu.memory_space<vmem>>, vector<32x16xbf16>
      %cst_27 = arith.constant dense<0.000000e+00> : vector<1x16xf32>
      %32 = tpu.matmul %30, %31, %cst_27 {dimension_numbers = #tpu.dot_dimension_numbers<[1], [0], [0], [1], [0, 0, 1, 1], [], []>} : vector<1x32xbf16>, vector<32x16xbf16>, vector<1x16xf32> -> vector<1x16xf32>
      %c0_28 = arith.constant 0 : index
      %c0_29 = arith.constant 0 : index
      %33 = vector.load %arg7[%c0_28, %c0_29] : memref<1x16xf32, #tpu.memory_space<vmem>>, vector<1x16xf32>
      %34 = arith.addf %32, %33 : vector<1x16xf32>
      %35 = math.absf %34 : vector<1x16xf32>
      %cst_30 = arith.constant 0.000000e+00 : f32
      %36 = vector.broadcast %cst_30 : f32 to vector<1x16xf32>
      %37 = arith.subf %36, %35 : vector<1x16xf32>
      %38 = math.exp %37 : vector<1x16xf32>
      %cst_31 = arith.constant 0.000000e+00 : f32
      %39 = vector.broadcast %cst_31 : f32 to vector<1x16xf32>
      %40 = arith.cmpf oge, %34, %39 : vector<1x16xf32>
      %cst_32 = arith.constant 1.000000e+00 : f32
      %41 = vector.broadcast %cst_32 : f32 to vector<1x16xf32>
      %42 = arith.addf %41, %38 : vector<1x16xf32>
      %cst_33 = arith.constant 1.000000e+00 : f32
      %43 = vector.broadcast %cst_33 : f32 to vector<1x16xf32>
      %44 = arith.divf %43, %42 : vector<1x16xf32>
      %cst_34 = arith.constant 1.000000e+00 : f32
      %45 = vector.broadcast %cst_34 : f32 to vector<1x16xf32>
      %46 = arith.addf %45, %38 : vector<1x16xf32>
      %47 = arith.divf %38, %46 : vector<1x16xf32>
      %48 = arith.select %40, %44, %47 : vector<1x16xi1>, vector<1x16xf32>
      %c0_35 = arith.constant 0 : index
      %c0_36 = arith.constant 0 : index
      %c0_37 = arith.constant 0 : index
      %49 = vector.load %arg9[%c0_35, %c0_36, %c0_37] : memref<1x1x16xf32, #tpu.memory_space<vmem>>, vector<1x1x16xf32>
      %50 = vector.shape_cast %49 : vector<1x1x16xf32> to vector<1x16xf32>
      %51 = vector.shape_cast %48 : vector<1x16xf32> to vector<1x1x16xf32>
      tpu.vector_store %arg9[%c0_35, %c0_36, %c0_37], %51 {strides = array<i32>} : memref<1x1x16xf32, #tpu.memory_space<vmem>>, vector<1x1x16xf32>,
    } else {
    }
    return
  }
  func.func @transform_0(%arg0: i32, %arg1: i32) -> (i32, i32, i32) {
    %c0_i32 = arith.constant 0 : i32
    %c0_i32_0 = arith.constant 0 : i32
    return %arg0, %arg1, %c0_i32 : i32, i32, i32
  }
  func.func @transform_1(%arg0: i32, %arg1: i32) -> (i32, i32) {
    %c0_i32 = arith.constant 0 : i32
    %c0_i32_0 = arith.constant 0 : i32
    %c0_i32_1 = arith.constant 0 : i32
    return %c0_i32, %c0_i32_0 : i32, i32
  }
  func.func @transform_2(%arg0: i32, %arg1: i32) -> (i32, i32) {
    %c0_i32 = arith.constant 0 : i32
    %c0_i32_0 = arith.constant 0 : i32
    %c0_i32_1 = arith.constant 0 : i32
    return %c0_i32, %c0_i32_0 : i32, i32
  }
  func.func @transform_3(%arg0: i32, %arg1: i32) -> (i32, i32) {
    %c0_i32 = arith.constant 0 : i32
    %c0_i32_0 = arith.constant 0 : i32
    %c0_i32_1 = arith.constant 0 : i32
    return %c0_i32, %c0_i32_0 : i32, i32
  }
  func.func @transform_4(%arg0: i32, %arg1: i32) -> (i32, i32) {
    %c0_i32 = arith.constant 0 : i32
    %c0_i32_0 = arith.constant 0 : i32
    %c0_i32_1 = arith.constant 0 : i32
    return %c0_i32, %c0_i32_0 : i32, i32
  }
  func.func @transform_5(%arg0: i32, %arg1: i32) -> (i32, i32) {
    %c0_i32 = arith.constant 0 : i32
    %c0_i32_0 = arith.constant 0 : i32
    %c0_i32_1 = arith.constant 0 : i32
    return %c0_i32, %c0_i32_0 : i32, i32
  }
  func.func @transform_6(%arg0: i32, %arg1: i32) -> (i32, i32, i32) {
    %c0_i32 = arith.constant 0 : i32
    %c0_i32_0 = arith.constant 0 : i32
    %c0_i32_1 = arith.constant 0 : i32
    return %arg0, %c0_i32, %c0_i32_0 : i32, i32, i32
  }
  func.func @transform_7(%arg0: i32, %arg1: i32) -> (i32, i32, i32) {
    %c0_i32 = arith.constant 0 : i32
    %c0_i32_0 = arith.constant 0 : i32
    %c0_i32_1 = arith.constant 0 : i32
    return %arg0, %c0_i32, %c0_i32_0 : i32, i32, i32
  }
}

</mosaic_0001>

<llo_original>
// kernel: tpu_custom_call.1
$region0: #{tpu_custom_call.1}
  #allocation0 [shape = 'u32[]', space=smem, size = 0x4, offset = 0x4, fixed_abs, tag = 'smem constant byte address 0x4 - core index']
  #allocation1 [shape = 'u32[144,128]{1,0:T(1,128)}', space=vmem, size = 0x12000, scoped, tag = 'internal scratch']
  #allocation2 [shape = 'f32[1,128]{1,0:T(1,128)}', space=vmem, size = 0x200, scoped, tag = 'scratch operand']
  %s0 = inlined_call_operand.vmem [shape: bf16[2,256,32], index: 0, kind: input, shape index: {}]
  %s1 = inlined_call_operand.vmem [shape: bf16[32,128], index: 1, kind: input, shape index: {}]
  %s2 = inlined_call_operand.vmem [shape: bf16[128,32], index: 2, kind: input, shape index: {}]
  %s3 = inlined_call_operand.vmem [shape: f32[1,32], index: 3, kind: input, shape index: {}]
  %s4 = inlined_call_operand.vmem [shape: bf16[32,16], index: 4, kind: input, shape index: {}]
  %s5 = inlined_call_operand.vmem [shape: f32[1,16], index: 5, kind: input, shape index: {}]
  %s6 = inlined_call_operand.hbm [shape: f32[2,1,128], index: 6, kind: output, shape index: {0}]
  %s7 = inlined_call_operand.hbm [shape: f32[2,1,16], index: 7, kind: output, shape index: {1}]
  %8 = xla_tuple %s6, %s7
  %s9 = sld [smem:[#allocation0]]
  $region73: #{tpu_custom_call.1} parent=0
    _
  %s11 = ssub.s32 1, %s9
  %s12 = scalar_select 0, %s11, %s9
  $region1: #{tpu_custom_call.1} parent=0
    #allocation3 [shape = 'u8[1024]{0}', space=vmem, size = 0x400, scoped, tag = 'output window, operand 0']
    #allocation4 [shape = 's32[2]{0}', space=sflag, size = 0x8, scoped, tag = 'scoped memory for tpu_custom_call.1']
    #allocation5 [shape = 'u8[1024]{0}', space=vmem, size = 0x400, scoped, tag = 'output window, operand 1']
    #allocation6 [shape = 's32[2]{0}', space=sflag, size = 0x8, scoped, tag = 'scoped memory for tpu_custom_call.1']
    %13 = vsyncpa [#allocation4], 0
    %s14 = scalar_lea.sflag [#allocation4], 1
    %15 = vsyncpa %s14, 0
    %16 = vsyncpa [#allocation6], 0
    %s17 = scalar_lea.sflag [#allocation6], 1
    %18 = vsyncpa %s17, 0
    loop: start=0, step=1, limit=4
    $region2: #{tpu_custom_call.1} parent=1 // loop_pre_header
      _
    $region3: #{tpu_custom_call.1} parent=1 // loop_header
      %s20 = sphi 0, %s24
      %p21 = scmp.ge.s32.totalorder %s20, 4
      %s27 = sphi 0, %s39
      %s28 = sphi 0, %s35
      %s29 = sphi 0, %s27
      %s30 = sphi 0, %s28
      %s31 = sphi 0, %s29
      %s32 = sphi 0, %s30
      %s44 = sphi 0, %s46
      %s47 = sphi 0, %s44
      %s48 = sphi 0, %s47
      %s64 = sphi 0, %s48
      %s68 = sphi 0, %s68
      %s70 = sphi 0, %s68
      %s71 = sphi 0, %s70
      %s85 = sphi 0, %s71
      %s89 = sphi 0, %s89
      %s91 = sphi 0, %s89
      %s92 = sphi 0, %s91
      %s106 = sphi 0, %s92
      %s110 = sphi 0, %s110
      %s112 = sphi 0, %s110
      %s113 = sphi 0, %s112
      %s127 = sphi 0, %s113
      %s131 = sphi 0, %s131
      %s133 = sphi 0, %s131
      %s134 = sphi 0, %s133
      %s148 = sphi 0, %s134
      %s152 = sphi 0, %s152
      %s154 = sphi 0, %s152
      %s155 = sphi 0, %s154
      %s169 = sphi 0, %s155
      %s175 = sphi 0, %s177
      %s178 = sphi 0, %s175
      %s179 = sphi 0, %s178
      %s195 = sphi 0, %s179
      %s201 = sphi 0, %s203
      %s204 = sphi 0, %s201
      %s205 = sphi 0, %s204
      %s221 = sphi 0, %s205
    $region4: #{tpu_custom_call.1} parent=1 // loop_header_branch
      %23 = sbr.rel (%p21) target = $region8
    $region5: #{tpu_custom_call.1} parent=1 // loop_body
      %s25 = ssub.s32 %s20, 1
      %s26 = ssub.s32 %s20, 2
      %s33 = sadd.s32 1, %s28
      %p34 = scmp.ge.s32.totalorder %s33, 1
      %s35 = scalar_select %p34, 0, %s33
      %s36 = sadd.s32 1, %s27
      %s37 = scalar_select %p34, %s36, %s27
      %p38 = scmp.ge.s32.totalorder %s37, 2
      %s39 = scalar_select %p38, 0, %s37
      %s40 = ssub.s32 %s27, %s39
      %s41 = ssub.s32 %s28, %s35
      %s42 = sor.u32 %s40, %s41
      %p43 = scmp.eq.s32.totalorder %s42, 0
      %s45 = sadd.s32 %s44, 1
      %s46 = scalar_select %p43, %s44, %s45
      %p49 = pneg %p43
      %p50 = scmp.eq.s32.totalorder %s20, 1
      %p51 = por %p49, %p50
      %p52 = scmp.ne.s32.totalorder %s44, %s47
      %p53 = scmp.eq.s32.totalorder %s20, 0
      %p54 = por %p52, %p53
      %p55 = scmp.ne.s32.totalorder %s44, %s47
      %p56 = scmp.eq.s32.totalorder %s25, 1
      %p57 = por %p55, %p56
      %p58 = scmp.ne.s32.totalorder %s47, %s48
      %p59 = scmp.eq.s32.totalorder %s25, 0
      %p60 = por %p58, %p59
      %p61 = scmp.ne.s32.totalorder %s47, %s48
      %p62 = scmp.eq.s32.totalorder %s26, 1
      %p63 = por %p61, %p62
      %p65 = scmp.ne.s32.totalorder %s48, %s64
      %p66 = scmp.eq.s32.totalorder %s26, 0
      %p67 = por %p65, %p66
      %s69 = sadd.s32 %s68, 1
      %p72 = scmp.eq.s32.totalorder %s20, 1
      %p73 = scmp.ne.s32.totalorder %s68, %s70
      %p74 = scmp.eq.s32.totalorder %s20, 0
      %p75 = por %p73, %p74
      %p76 = scmp.ne.s32.totalorder %s68, %s70
      %p77 = scmp.eq.s32.totalorder %s25, 1
      %p78 = por %p76, %p77
      %p79 = scmp.ne.s32.totalorder %s70, %s71
      %p80 = scmp.eq.s32.totalorder %s25, 0
      %p81 = por %p79, %p80
      %p82 = scmp.ne.s32.totalorder %s70, %s71
      %p83 = scmp.eq.s32.totalorder %s26, 1
      %p84 = por %p82, %p83
      %p86 = scmp.ne.s32.totalorder %s71, %s85
      %p87 = scmp.eq.s32.totalorder %s26, 0
      %p88 = por %p86, %p87
      %s90 = sadd.s32 %s89, 1
      %p93 = scmp.eq.s32.totalorder %s20, 1
      %p94 = scmp.ne.s32.totalorder %s89, %s91
      %p95 = scmp.eq.s32.totalorder %s20, 0
      %p96 = por %p94, %p95
      %p97 = scmp.ne.s32.totalorder %s89, %s91
      %p98 = scmp.eq.s32.totalorder %s25, 1
      %p99 = por %p97, %p98
      %p100 = scmp.ne.s32.totalorder %s91, %s92
      %p101 = scmp.eq.s32.totalorder %s25, 0
      %p102 = por %p100, %p101
      %p103 = scmp.ne.s32.totalorder %s91, %s92
      %p104 = scmp.eq.s32.totalorder %s26, 1
      %p105 = por %p103, %p104
      %p107 = scmp.ne.s32.totalorder %s92, %s106
      %p108 = scmp.eq.s32.totalorder %s26, 0
      %p109 = por %p107, %p108
      %s111 = sadd.s32 %s110, 1
      %p114 = scmp.eq.s32.totalorder %s20, 1
      %p115 = scmp.ne.s32.totalorder %s110, %s112
      %p116 = scmp.eq.s32.totalorder %s20, 0
      %p117 = por %p115, %p116
      %p118 = scmp.ne.s32.totalorder %s110, %s112
      %p119 = scmp.eq.s32.totalorder %s25, 1
      %p120 = por %p118, %p119
      %p121 = scmp.ne.s32.totalorder %s112, %s113
      %p122 = scmp.eq.s32.totalorder %s25, 0
      %p123 = por %p121, %p122
      %p124 = scmp.ne.s32.totalorder %s112, %s113
      %p125 = scmp.eq.s32.totalorder %s26, 1
      %p126 = por %p124, %p125
      %p128 = scmp.ne.s32.totalorder %s113, %s127
      %p129 = scmp.eq.s32.totalorder %s26, 0
      %p130 = por %p128, %p129
      %s132 = sadd.s32 %s131, 1
      %p135 = scmp.eq.s32.totalorder %s20, 1
      %p136 = scmp.ne.s32.totalorder %s131, %s133
      %p137 = scmp.eq.s32.totalorder %s20, 0
      %p138 = por %p136, %p137
      %p139 = scmp.ne.s32.totalorder %s131, %s133
      %p140 = scmp.eq.s32.totalorder %s25, 1
      %p141 = por %p139, %p140
      %p142 = scmp.ne.s32.totalorder %s133, %s134
      %p143 = scmp.eq.s32.totalorder %s25, 0
      %p144 = por %p142, %p143
      %p145 = scmp.ne.s32.totalorder %s133, %s134
      %p146 = scmp.eq.s32.totalorder %s26, 1
      %p147 = por %p145, %p146
      %p149 = scmp.ne.s32.totalorder %s134, %s148
      %p150 = scmp.eq.s32.totalorder %s26, 0
      %p151 = por %p149, %p150
      %s153 = sadd.s32 %s152, 1
      %p156 = scmp.eq.s32.totalorder %s20, 1
      %p157 = scmp.ne.s32.totalorder %s152, %s154
      %p158 = scmp.eq.s32.totalorder %s20, 0
      %p159 = por %p157, %p158
      %p160 = scmp.ne.s32.totalorder %s152, %s154
      %p161 = scmp.eq.s32.totalorder %s25, 1
      %p162 = por %p160, %p161
      %p163 = scmp.ne.s32.totalorder %s154, %s155
      %p164 = scmp.eq.s32.totalorder %s25, 0
      %p165 = por %p163, %p164
      %p166 = scmp.ne.s32.totalorder %s154, %s155
      %p167 = scmp.eq.s32.totalorder %s26, 1
      %p168 = por %p166, %p167
      %p170 = scmp.ne.s32.totalorder %s155, %s169
      %p171 = scmp.eq.s32.totalorder %s26, 0
      %p172 = por %p170, %p171
      %s173 = ssub.s32 %s27, %s39
      %p174 = scmp.eq.s32.totalorder %s173, 0
      %s176 = sadd.s32 %s175, 1
      %s177 = scalar_select %p174, %s175, %s176
      %p180 = pneg %p174
      %p181 = scmp.eq.s32.totalorder %s20, 1
      %p182 = por %p180, %p181
      %p183 = scmp.ne.s32.totalorder %s175, %s178
      %p184 = scmp.eq.s32.totalorder %s20, 0
      %p185 = por %p183, %p184
      %p186 = scmp.ne.s32.totalorder %s175, %s178
      %p187 = scmp.eq.s32.totalorder %s25, 1
      %p188 = por %p186, %p187
      %p189 = scmp.ne.s32.totalorder %s178, %s179
      %p190 = scmp.eq.s32.totalorder %s25, 0
      %p191 = por %p189, %p190
      %p192 = scmp.ne.s32.totalorder %s178, %s179
      %p193 = scmp.eq.s32.totalorder %s26, 1
      %p194 = por %p192, %p193
      %p196 = scmp.ne.s32.totalorder %s179, %s195
      %p197 = scmp.eq.s32.totalorder %s26, 0
      %p198 = por %p196, %p197
      %s199 = ssub.s32 %s27, %s39
      %p200 = scmp.eq.s32.totalorder %s199, 0
      %s202 = sadd.s32 %s201, 1
      %s203 = scalar_select %p200, %s201, %s202
      %p206 = pneg %p200
      %p207 = scmp.eq.s32.totalorder %s20, 1
      %p208 = por %p206, %p207
      %p209 = scmp.ne.s32.totalorder %s201, %s204
      %p210 = scmp.eq.s32.totalorder %s20, 0
      %p211 = por %p209, %p210
      %p212 = scmp.ne.s32.totalorder %s201, %s204
      %p213 = scmp.eq.s32.totalorder %s25, 1
      %p214 = por %p212, %p213
      %p215 = scmp.ne.s32.totalorder %s204, %s205
      %p216 = scmp.eq.s32.totalorder %s25, 0
      %p217 = por %p215, %p216
      %p218 = scmp.ne.s32.totalorder %s204, %s205
      %p219 = scmp.eq.s32.totalorder %s26, 1
      %p220 = por %p218, %p219
      %p222 = scmp.ne.s32.totalorder %s205, %s221
      %p223 = scmp.eq.s32.totalorder %s26, 0
      %p224 = por %p222, %p223
      %p225 = scmp.le.s32.totalorder 1, %s20
      %p226 = scmp.lt.s32.totalorder %s20, 3
      %p227 = pnand %p225, %p226
      %p228 = pneg %p227
      // Predicated region
      $region9: #{tpu_custom_call.1} parent=5 // pred_check
        _
      $region10: #{tpu_custom_call.1} parent=5 // pred_check_branch
        %230 = sbr.rel (%p227) target = $region12
      $region11: #{tpu_custom_call.1} parent=5 // pred_region
        %s231 = ssub.s32 %s20, 1
        // Predicated region
        $region13: #{tpu_custom_call.1} parent=11 // pred_check
          %p232 = pneg %p81
        $region14: #{tpu_custom_call.1} parent=11 // pred_check_branch
          %234 = sbr.rel (%p232) target = $region16
        $region15: #{tpu_custom_call.1} parent=11 // pred_region
          _
        $region16: #{tpu_custom_call.1} parent=11 // pred_fallthru
          _
        // Predicated region
        $region17: #{tpu_custom_call.1} parent=11 // pred_check
          %p235 = pneg %p102
        $region18: #{tpu_custom_call.1} parent=11 // pred_check_branch
          %237 = sbr.rel (%p235) target = $region20
        $region19: #{tpu_custom_call.1} parent=11 // pred_region
          _
        $region20: #{tpu_custom_call.1} parent=11 // pred_fallthru
          _
        // Predicated region
        $region21: #{tpu_custom_call.1} parent=11 // pred_check
          %p238 = pneg %p123
        $region22: #{tpu_custom_call.1} parent=11 // pred_check_branch
          %240 = sbr.rel (%p238) target = $region24
        $region23: #{tpu_custom_call.1} parent=11 // pred_region
          _
        $region24: #{tpu_custom_call.1} parent=11 // pred_fallthru
          _
        // Predicated region
        $region25: #{tpu_custom_call.1} parent=11 // pred_check
          %p241 = pneg %p144
        $region26: #{tpu_custom_call.1} parent=11 // pred_check_branch
          %243 = sbr.rel (%p241) target = $region28
        $region27: #{tpu_custom_call.1} parent=11 // pred_region
          _
        $region28: #{tpu_custom_call.1} parent=11 // pred_fallthru
          _
        // Predicated region
        $region29: #{tpu_custom_call.1} parent=11 // pred_check
          %p244 = pneg %p165
        $region30: #{tpu_custom_call.1} parent=11 // pred_check_branch
          %246 = sbr.rel (%p244) target = $region32
        $region31: #{tpu_custom_call.1} parent=11 // pred_region
          _
        $region32: #{tpu_custom_call.1} parent=11 // pred_fallthru
          _
      $region12: #{tpu_custom_call.1} parent=5 // pred_fallthru
        _
      %p247 = scmp.lt.s32.totalorder %s20, 2
      // Predicated region
      $region33: #{tpu_custom_call.1} parent=5 // pred_check
        %p248 = pneg %p247
      $region34: #{tpu_custom_call.1} parent=5 // pred_check_branch
        %250 = sbr.rel (%p248) target = $region36
      $region35: #{tpu_custom_call.1} parent=5 // pred_region
        // Predicated region
        $region37: #{tpu_custom_call.1} parent=35 // pred_check
          %p251 = pneg %p54
        $region38: #{tpu_custom_call.1} parent=35 // pred_check_branch
          %253 = sbr.rel (%p251) target = $region40
        $region39: #{tpu_custom_call.1} parent=35 // pred_region
          %s254 = smul.u32 32, %s28
          %p255 = scmp.lt.s32.totalorder %s27, 1
          %s256 = scalar_select %p255, %s27, 1
          %p257 = scmp.lt.s32.totalorder %s254, 31
          %s258 = scalar_select %p257, %s254, 31
          %s259 = smul.addr %s256, 32
          %s260 = sadd.s32 %s258, %s259
          %s261 = smul.addr %s260, 4
          %s262 = scalar_lea.vmem %s0, %s261
          %s263 = smul.u32 32, %s28
        $region40: #{tpu_custom_call.1} parent=35 // pred_fallthru
          _
      $region36: #{tpu_custom_call.1} parent=5 // pred_fallthru
        _
      %p264 = scmp.le.s32.totalorder 1, %s20
      %p265 = scmp.lt.s32.totalorder %s20, 3
      %p266 = pnand %p264, %p265
      %p267 = pneg %p266
      // Predicated region
      $region41: #{tpu_custom_call.1} parent=5 // pred_check
        _
      $region42: #{tpu_custom_call.1} parent=5 // pred_check_branch
        %269 = sbr.rel (%p266) target = $region44
      $region43: #{tpu_custom_call.1} parent=5 // pred_region
        %s270 = ssub.s32 %s20, 1
        %s271 = smul.u32 32, %s30
        %p272 = scmp.lt.s32.totalorder %s29, 1
        %s273 = scalar_select %p272, %s29, 1
        %p274 = scmp.lt.s32.totalorder %s271, 31
        %s275 = scalar_select %p274, %s271, 31
        %s276 = smul.addr %s273, 32
        %s277 = sadd.s32 %s275, %s276
        %s278 = smul.addr %s277, 4
        %s279 = scalar_lea.vmem %s0, %s278
        %p280 = pneg %p60
        %p281 = pneg %p57
        %p282 = pneg %p81
        %p283 = pneg %p78
        %p284 = pneg %p102
        %p285 = pneg %p99
        %p286 = pneg %p123
        %p287 = pneg %p120
        %p288 = pneg %p144
        %p289 = pneg %p141
        %p290 = pneg %p165
        %p291 = pneg %p162
        %p292 = pneg %p191
        %p293 = pneg %p188
        %s294 = sand.u32 %s178, 1
        %s295 = scalar_lea.sflag [#allocation4], %s294
        %s296 = sand.u32 %s178, 1
        %s297 = scalar_lea.vmem [#allocation3], %s296
        %p298 = pneg %p217
        %p299 = pneg %p214
        %s300 = sand.u32 %s204, 1
        %s301 = scalar_lea.sflag [#allocation6], %s300
        %s302 = sand.u32 %s204, 1
        %s303 = scalar_lea.vmem [#allocation5], %s302
        %s304 = smul.u32 32, %s30
        %p305 = scmp.lt.s32.totalorder %s29, 1
        %s306 = scalar_select %p305, %s29, 1
        %p307 = scmp.lt.s32.totalorder %s304, 31
        %s308 = scalar_select %p307, %s304, 31
        %s309 = smul.addr %s306, 32
        %s310 = sadd.s32 %s308, %s309
        %s311 = smul.addr %s310, 4
        %s312 = scalar_lea.vmem %s0, %s311
        %s313 = smul.u32 32, %s30
        %p315 = scmp.eq.s32.totalorder %s30, 0
        // Predicated region
        $region45: #{tpu_custom_call.1} parent=43 // pred_check
          %p316 = pneg %p315
        $region46: #{tpu_custom_call.1} parent=43 // pred_check_branch
          %318 = sbr.rel (%p316) target = $region48
        $region47: #{tpu_custom_call.1} parent=43 // pred_region
          %319 = vst [vmem:[#allocation2] sm:$0x1] 0.0
        $region48: #{tpu_custom_call.1} parent=43 // pred_fallthru
          _
        %v320 = vld [vmem:[%s312] sm:$0xf]
        %v321 = vld [vmem:[%s312 + $0x4] sm:$0xf]
        %v322 = vld [vmem:[%s312 + $0x8] sm:$0xf]
        %v323 = vld [vmem:[%s312 + $0xc] sm:$0xf]
        %v324 = vld [vmem:[%s312 + $0x10] sm:$0xf]
        %v325 = vld [vmem:[%s312 + $0x14] sm:$0xf]
        %v326 = vld [vmem:[%s312 + $0x18] sm:$0xf]
        %v327 = vld [vmem:[%s312 + $0x1c] sm:$0xf]
        %v328 = vld [vmem:[%s312 + $0x20] sm:$0xf]
        %v329 = vld [vmem:[%s312 + $0x24] sm:$0xf]
        %v330 = vld [vmem:[%s312 + $0x28] sm:$0xf]
        %v331 = vld [vmem:[%s312 + $0x2c] sm:$0xf]
        %v332 = vld [vmem:[%s312 + $0x30] sm:$0xf]
        %v333 = vld [vmem:[%s312 + $0x34] sm:$0xf]
        %v334 = vld [vmem:[%s312 + $0x38] sm:$0xf]
        %v335 = vld [vmem:[%s312 + $0x3c] sm:$0xf]
        %v336 = vld [vmem:[%s312 + $0x40] sm:$0xf]
        %v337 = vld [vmem:[%s312 + $0x44] sm:$0xf]
        %v338 = vld [vmem:[%s312 + $0x48] sm:$0xf]
        %v339 = vld [vmem:[%s312 + $0x4c] sm:$0xf]
        %v340 = vld [vmem:[%s312 + $0x50] sm:$0xf]
        %v341 = vld [vmem:[%s312 + $0x54] sm:$0xf]
        %v342 = vld [vmem:[%s312 + $0x58] sm:$0xf]
        %v343 = vld [vmem:[%s312 + $0x5c] sm:$0xf]
        %v344 = vld [vmem:[%s312 + $0x60] sm:$0xf]
        %v345 = vld [vmem:[%s312 + $0x64] sm:$0xf]
        %v346 = vld [vmem:[%s312 + $0x68] sm:$0xf]
        %v347 = vld [vmem:[%s312 + $0x6c] sm:$0xf]
        %v348 = vld [vmem:[%s312 + $0x70] sm:$0xf]
        %v349 = vld [vmem:[%s312 + $0x74] sm:$0xf]
        %v350 = vld [vmem:[%s312 + $0x78] sm:$0xf]
        %v351 = vld [vmem:[%s312 + $0x7c] sm:$0xf]
        %v352 = vld [vmem:[%s1] sm:$0xf]
        %v353 = vld [vmem:[%s1 + $0x4] sm:$0xf]
        %v354 = vld [vmem:[%s1 + $0x8] sm:$0xf]
        %v355 = vld [vmem:[%s1 + $0xc] sm:$0xf]
        %v388 = vunpack.c.l.b16 %v320
        %v389 = vunpack.c.l.b16 %v321
        %v390 = vunpack.c.l.b16 %v322
        %v391 = vunpack.c.l.b16 %v323
        %v392 = vunpack.c.l.b16 %v324
        %v393 = vunpack.c.l.b16 %v325
        %v394 = vunpack.c.l.b16 %v326
        %v395 = vunpack.c.l.b16 %v327
        %v396 = vunpack.c.l.b16 %v328
        %v397 = vunpack.c.l.b16 %v329
        %v398 = vunpack.c.l.b16 %v330
        %v399 = vunpack.c.l.b16 %v331
        %v400 = vunpack.c.l.b16 %v332
        %v401 = vunpack.c.l.b16 %v333
        %v402 = vunpack.c.l.b16 %v334
        %v403 = vunpack.c.l.b16 %v335
        %v404 = vunpack.c.l.b16 %v336
        %v405 = vunpack.c.l.b16 %v337
        %v406 = vunpack.c.l.b16 %v338
        %v407 = vunpack.c.l.b16 %v339
        %v408 = vunpack.c.l.b16 %v340
        %v409 = vunpack.c.l.b16 %v341
        %v410 = vunpack.c.l.b16 %v342
        %v411 = vunpack.c.l.b16 %v343
        %v412 = vunpack.c.l.b16 %v344
        %v413 = vunpack.c.l.b16 %v345
        %v414 = vunpack.c.l.b16 %v346
        %v415 = vunpack.c.l.b16 %v347
        %v416 = vunpack.c.l.b16 %v348
        %v417 = vunpack.c.l.b16 %v349
        %v418 = vunpack.c.l.b16 %v350
        %v419 = vunpack.c.l.b16 %v351
        %v420 = vpack.c.b16 %v389, %v388
        %v421 = vpack.c.b16 %v391, %v390
        %v422 = vpack.c.b16 %v393, %v392
        %v423 = vpack.c.b16 %v395, %v394
        %v424 = vpack.c.b16 %v397, %v396
        %v425 = vpack.c.b16 %v399, %v398
        %v426 = vpack.c.b16 %v401, %v400
        %v427 = vpack.c.b16 %v403, %v402
        %v428 = vpack.c.b16 %v405, %v404
        %v429 = vpack.c.b16 %v407, %v406
        %v430 = vpack.c.b16 %v409, %v408
        %v431 = vpack.c.b16 %v411, %v410
        %v432 = vpack.c.b16 %v413, %v412
        %v433 = vpack.c.b16 %v415, %v414
        %v434 = vpack.c.b16 %v417, %v416
        %v435 = vpack.c.b16 %v419, %v418
        %v440 = vunpack.c.l.b16 %v352
        %v441 = vunpack.c.l.b16 %v353
        %v442 = vunpack.c.l.b16 %v354
        %v443 = vunpack.c.l.b16 %v355
        %v444 = vpack.c.b16 %v441, %v440
        %v445 = vpack.c.b16 %v443, %v442
        %vm448 = vcmask 261120
        %v450 = vsel %vm448, %v420, 0
        %v453 = vsel %vm448, %v421, 0
        %v456 = vsel %vm448, %v422, 0
        %v459 = vsel %vm448, %v423, 0
        %v462 = vsel %vm448, %v424, 0
        %v465 = vsel %vm448, %v425, 0
        %v468 = vsel %vm448, %v426, 0
        %v471 = vsel %vm448, %v427, 0
        %v474 = vsel %vm448, %v428, 0
        %v477 = vsel %vm448, %v429, 0
        %v480 = vsel %vm448, %v430, 0
        %v483 = vsel %vm448, %v431, 0
        %v486 = vsel %vm448, %v432, 0
        %v489 = vsel %vm448, %v433, 0
        %v492 = vsel %vm448, %v434, 0
        %v495 = vsel %vm448, %v435, 0
        %497 = vmatprep.subr.bf16.mxu0 0
        %498 = vmatpush1.bf16.msra.mxu0 %v444
        %499 = vmatprep.subr.bf16.mxu0 0
        %500 = vmatpush1.bf16.msra.mxu0 %v445
        %501 = vmatprep.subr.bf16.mxu0 0
        %502 = vmatpush1.bf16.msra.mxu0 0
        %503 = vmatprep.subr.bf16.mxu0 0
        %504 = vmatpush1.bf16.msra.mxu0 0
        %505 = vmatprep.subr.bf16.mxu0 0
        %506 = vmatpush1.bf16.msra.mxu0 0
        %507 = vmatprep.subr.bf16.mxu0 0
        %508 = vmatpush1.bf16.msra.mxu0 0
        %509 = vmatprep.subr.bf16.mxu0 0
        %510 = vmatpush1.bf16.msra.mxu0 0
        %511 = vmatprep.subr.bf16.mxu0 0
        %512 = vmatpush1.bf16.msra.mxu0 0
        %513 = vmatprep.subr.bf16.mxu0 0
        %514 = vmatpush1.bf16.msra.mxu0 0
        %515 = vmatprep.subr.bf16.mxu0 0
        %516 = vmatpush1.bf16.msra.mxu0 0
        %517 = vmatprep.subr.bf16.mxu0 0
        %518 = vmatpush1.bf16.msra.mxu0 0
        %519 = vmatprep.subr.bf16.mxu0 0
        %520 = vmatpush1.bf16.msra.mxu0 0
        %521 = vmatprep.subr.bf16.mxu0 0
        %522 = vmatpush1.bf16.msra.mxu0 0
        %523 = vmatprep.subr.bf16.mxu0 0
        %524 = vmatpush1.bf16.msra.mxu0 0
        %525 = vmatprep.subr.bf16.mxu0 0
        %526 = vmatpush1.bf16.msra.mxu0 0
        %527 = vmatprep.subr.bf16.mxu0 0
        %528 = vmatpush1.bf16.msra.mxu0 0
        %529 = vmatprep.mubr.bf16.mxu0 0
        %530 = vmatmul.mubr.bf16.gmra.mrb[0].mxu0 %v450
        %v531 = vpop.f32.mrb[0].mxu0
        %v532 = vadd.f32 0.0, %v531
        %v533 = vpop.f32.mrb[0].mxu0
        %v534 = vpop.f32.mrb[0].mxu0
        %v535 = vadd.f32 0.0, %v534
        %v536 = vpop.f32.mrb[0].mxu0
        %537 = vmatprep.mubr.bf16.mxu0 0
        %538 = vmatmul.mubr.bf16.gmra.mrb[0].mxu0 %v453
        %v539 = vpop.f32.mrb[0].mxu0
        %v540 = vadd.f32 0.0, %v539
        %v541 = vpop.f32.mrb[0].mxu0
        %v542 = vpop.f32.mrb[0].mxu0
        %v543 = vadd.f32 0.0, %v542
        %v544 = vpop.f32.mrb[0].mxu0
        %545 = vmatprep.mubr.bf16.mxu0 0
        %546 = vmatmul.mubr.bf16.gmra.mrb[0].mxu0 %v456
        %v547 = vpop.f32.mrb[0].mxu0
        %v548 = vadd.f32 0.0, %v547
        %v549 = vpop.f32.mrb[0].mxu0
        %v550 = vpop.f32.mrb[0].mxu0
        %v551 = vadd.f32 0.0, %v550
        %v552 = vpop.f32.mrb[0].mxu0
        %553 = vmatprep.mubr.bf16.mxu0 0
        %554 = vmatmul.mubr.bf16.gmra.mrb[0].mxu0 %v459
        %v555 = vpop.f32.mrb[0].mxu0
        %v556 = vadd.f32 0.0, %v555
        %v557 = vpop.f32.mrb[0].mxu0
        %v558 = vpop.f32.mrb[0].mxu0
        %v559 = vadd.f32 0.0, %v558
        %v560 = vpop.f32.mrb[0].mxu0
        %561 = vmatprep.mubr.bf16.mxu0 0
        %562 = vmatmul.mubr.bf16.gmra.mrb[0].mxu0 %v462
        %v563 = vpop.f32.mrb[0].mxu0
        %v564 = vadd.f32 0.0, %v563
        %v565 = vpop.f32.mrb[0].mxu0
        %v566 = vpop.f32.mrb[0].mxu0
        %v567 = vadd.f32 0.0, %v566
        %v568 = vpop.f32.mrb[0].mxu0
        %569 = vmatprep.mubr.bf16.mxu0 0
        %570 = vmatmul.mubr.bf16.gmra.mrb[0].mxu0 %v465
        %v571 = vpop.f32.mrb[0].mxu0
        %v572 = vadd.f32 0.0, %v571
        %v573 = vpop.f32.mrb[0].mxu0
        %v574 = vpop.f32.mrb[0].mxu0
        %v575 = vadd.f32 0.0, %v574
        %v576 = vpop.f32.mrb[0].mxu0
        %577 = vmatprep.mubr.bf16.mxu0 0
        %578 = vmatmul.mubr.bf16.gmra.mrb[0].mxu0 %v468
        %v579 = vpop.f32.mrb[0].mxu0
        %v580 = vadd.f32 0.0, %v579
        %v581 = vpop.f32.mrb[0].mxu0
        %v582 = vpop.f32.mrb[0].mxu0
        %v583 = vadd.f32 0.0, %v582
        %v584 = vpop.f32.mrb[0].mxu0
        %585 = vmatprep.mubr.bf16.mxu0 0
        %586 = vmatmul.mubr.bf16.gmra.mrb[0].mxu0 %v471
        %v587 = vpop.f32.mrb[0].mxu0
        %v588 = vadd.f32 0.0, %v587
        %v589 = vpop.f32.mrb[0].mxu0
        %v590 = vpop.f32.mrb[0].mxu0
        %v591 = vadd.f32 0.0, %v590
        %v592 = vpop.f32.mrb[0].mxu0
        %593 = vmatprep.mubr.bf16.mxu0 0
        %594 = vmatmul.mubr.bf16.gmra.mrb[0].mxu0 %v474
        %v595 = vpop.f32.mrb[0].mxu0
        %v596 = vadd.f32 0.0, %v595
        %v597 = vpop.f32.mrb[0].mxu0
        %v598 = vpop.f32.mrb[0].mxu0
        %v599 = vadd.f32 0.0, %v598
        %v600 = vpop.f32.mrb[0].mxu0
        %601 = vmatprep.mubr.bf16.mxu0 0
        %602 = vmatmul.mubr.bf16.gmra.mrb[0].mxu0 %v477
        %v603 = vpop.f32.mrb[0].mxu0
        %v604 = vadd.f32 0.0, %v603
        %v605 = vpop.f32.mrb[0].mxu0
        %v606 = vpop.f32.mrb[0].mxu0
        %v607 = vadd.f32 0.0, %v606
        %v608 = vpop.f32.mrb[0].mxu0
        %609 = vmatprep.mubr.bf16.mxu0 0
        %610 = vmatmul.mubr.bf16.gmra.mrb[0].mxu0 %v480
        %v611 = vpop.f32.mrb[0].mxu0
        %v612 = vadd.f32 0.0, %v611
        %v613 = vpop.f32.mrb[0].mxu0
        %v614 = vpop.f32.mrb[0].mxu0
        %v615 = vadd.f32 0.0, %v614
        %v616 = vpop.f32.mrb[0].mxu0
        %617 = vmatprep.mubr.bf16.mxu0 0
        %618 = vmatmul.mubr.bf16.gmra.mrb[0].mxu0 %v483
        %v619 = vpop.f32.mrb[0].mxu0
        %v620 = vadd.f32 0.0, %v619
        %v621 = vpop.f32.mrb[0].mxu0
        %v622 = vpop.f32.mrb[0].mxu0
        %v623 = vadd.f32 0.0, %v622
        %v624 = vpop.f32.mrb[0].mxu0
        %625 = vmatprep.mubr.bf16.mxu0 0
        %626 = vmatmul.mubr.bf16.gmra.mrb[0].mxu0 %v486
        %v627 = vpop.f32.mrb[0].mxu0
        %v628 = vadd.f32 0.0, %v627
        %v629 = vpop.f32.mrb[0].mxu0
        %v630 = vpop.f32.mrb[0].mxu0
        %v631 = vadd.f32 0.0, %v630
        %v632 = vpop.f32.mrb[0].mxu0
        %633 = vmatprep.mubr.bf16.mxu0 0
        %634 = vmatmul.mubr.bf16.gmra.mrb[0].mxu0 %v489
        %v635 = vpop.f32.mrb[0].mxu0
        %v636 = vadd.f32 0.0, %v635
        %v637 = vpop.f32.mrb[0].mxu0
        %v638 = vpop.f32.mrb[0].mxu0
        %v639 = vadd.f32 0.0, %v638
        %v640 = vpop.f32.mrb[0].mxu0
        %641 = vmatprep.mubr.bf16.mxu0 0
        %642 = vmatmul.mubr.bf16.gmra.mrb[0].mxu0 %v492
        %v643 = vpop.f32.mrb[0].mxu0
        %v644 = vadd.f32 0.0, %v643
        %v645 = vpop.f32.mrb[0].mxu0
        %v646 = vpop.f32.mrb[0].mxu0
        %v647 = vadd.f32 0.0, %v646
        %v648 = vpop.f32.mrb[0].mxu0
        %649 = vmatprep.mubr.bf16.mxu0 0
        %650 = vmatmul.mubr.bf16.gmra.mrb[0].mxu0 %v495
        %v651 = vpop.f32.mrb[0].mxu0
        %v652 = vadd.f32 0.0, %v651
        %v653 = vpop.f32.mrb[0].mxu0
        %v654 = vpop.f32.mrb[0].mxu0
        %v655 = vadd.f32 0.0, %v654
        %v656 = vpop.f32.mrb[0].mxu0
        %657 = vdwg.mxu0
        %v658 = vmax.f32 %v532, 0.0
        %v659 = vmax.f32 %v535, 0.0
        %v660 = vmax.f32 %v540, 0.0
        %v661 = vmax.f32 %v543, 0.0
        %v662 = vmax.f32 %v548, 0.0
        %v663 = vmax.f32 %v551, 0.0
        %v664 = vmax.f32 %v556, 0.0
        %v665 = vmax.f32 %v559, 0.0
        %v666 = vmax.f32 %v564, 0.0
        %v667 = vmax.f32 %v567, 0.0
        %v668 = vmax.f32 %v572, 0.0
        %v669 = vmax.f32 %v575, 0.0
        %v670 = vmax.f32 %v580, 0.0
        %v671 = vmax.f32 %v583, 0.0
        %v672 = vmax.f32 %v588, 0.0
        %v673 = vmax.f32 %v591, 0.0
        %v674 = vmax.f32 %v596, 0.0
        %v675 = vmax.f32 %v599, 0.0
        %v676 = vmax.f32 %v604, 0.0
        %v677 = vmax.f32 %v607, 0.0
        %v678 = vmax.f32 %v612, 0.0
        %v679 = vmax.f32 %v615, 0.0
        %v680 = vmax.f32 %v620, 0.0
        %v681 = vmax.f32 %v623, 0.0
        %v682 = vmax.f32 %v628, 0.0
        %v683 = vmax.f32 %v631, 0.0
        %v684 = vmax.f32 %v636, 0.0
        %v685 = vmax.f32 %v639, 0.0
        %v686 = vmax.f32 %v644, 0.0
        %v687 = vmax.f32 %v647, 0.0
        %v688 = vmax.f32 %v652, 0.0
        %v689 = vmax.f32 %v655, 0.0
        %v690 = vld [vmem:[#allocation2] sm:$0x1]
        %v691 = vadd.f32 %v658, %v659
        %v692 = vadd.f32 %v691, %v660
        %v693 = vadd.f32 %v692, %v661
        %v694 = vadd.f32 %v693, %v662
        %v695 = vadd.f32 %v694, %v663
        %v696 = vadd.f32 %v695, %v664
        %v697 = vadd.f32 %v696, %v665
        %v698 = vadd.f32 %v697, %v666
        %v699 = vadd.f32 %v698, %v667
        %v700 = vadd.f32 %v699, %v668
        %v701 = vadd.f32 %v700, %v669
        %v702 = vadd.f32 %v701, %v670
        %v703 = vadd.f32 %v702, %v671
        %v704 = vadd.f32 %v703, %v672
        %v705 = vadd.f32 %v704, %v673
        %v706 = vadd.f32 %v705, %v674
        %v707 = vadd.f32 %v706, %v675
        %v708 = vadd.f32 %v707, %v676
        %v709 = vadd.f32 %v708, %v677
        %v710 = vadd.f32 %v709, %v678
        %v711 = vadd.f32 %v710, %v679
        %v712 = vadd.f32 %v711, %v680
        %v713 = vadd.f32 %v712, %v681
        %v714 = vadd.f32 %v713, %v682
        %v715 = vadd.f32 %v714, %v683
        %v716 = vadd.f32 %v715, %v684
        %v717 = vadd.f32 %v716, %v685
        %v718 = vadd.f32 %v717, %v686
        %v719 = vadd.f32 %v718, %v687
        %v720 = vadd.f32 %v719, %v688
        %v721 = vadd.f32 %v720, %v689
        %v722 = vrot.slane %v721, 4
        %v723 = vadd.f32 %v721, %v722
        %v724 = vrot.slane %v723, 2
        %v725 = vadd.f32 %v723, %v724
        %v726 = vrot.slane %v725, 1
        %v727 = vadd.f32 %v725, %v726
        %v728 = vadd.f32 %v690, %v727
        %729 = vst [vmem:[#allocation2] sm:$0x1] %v728
        // Predicated region
        $region49: #{tpu_custom_call.1} parent=43 // pred_check
          %p730 = pneg %p315
        $region50: #{tpu_custom_call.1} parent=43 // pred_check_branch
          %732 = sbr.rel (%p730) target = $region52
        $region51: #{tpu_custom_call.1} parent=43 // pred_region
          %v733 = vld [vmem:[#allocation2] sm:$0x1]
          %v734 = vmul.f32 %v733, 0.00390625
          %735 = vst [vmem:[%s297] sm:$0x1] %v734
          %v736 = vpack.c.bf16 %v734, %v734
          %v737 = vld [vmem:[%s2] sm:$0xf]
          %v738 = vld [vmem:[%s2 + $0x4] sm:$0xf]
          %v739 = vld [vmem:[%s2 + $0x8] sm:$0xf]
          %v740 = vld [vmem:[%s2 + $0xc] sm:$0xf]
          %v741 = vld [vmem:[%s2 + $0x10] sm:$0xf]
          %v742 = vld [vmem:[%s2 + $0x14] sm:$0xf]
          %v743 = vld [vmem:[%s2 + $0x18] sm:$0xf]
          %v744 = vld [vmem:[%s2 + $0x1c] sm:$0xf]
          %v745 = vld [vmem:[%s2 + $0x20] sm:$0xf]
          %v746 = vld [vmem:[%s2 + $0x24] sm:$0xf]
          %v747 = vld [vmem:[%s2 + $0x28] sm:$0xf]
          %v748 = vld [vmem:[%s2 + $0x2c] sm:$0xf]
          %v749 = vld [vmem:[%s2 + $0x30] sm:$0xf]
          %v750 = vld [vmem:[%s2 + $0x34] sm:$0xf]
          %v751 = vld [vmem:[%s2 + $0x38] sm:$0xf]
          %v752 = vld [vmem:[%s2 + $0x3c] sm:$0xf]
          %v753 = vld [vmem:[%s3] sm:$0x1]
          %v770 = vunpack.c.l.b16 %v737
          %v771 = vunpack.c.l.b16 %v738
          %v772 = vunpack.c.l.b16 %v739
          %v773 = vunpack.c.l.b16 %v740
          %v774 = vunpack.c.l.b16 %v741
          %v775 = vunpack.c.l.b16 %v742
          %v776 = vunpack.c.l.b16 %v743
          %v777 = vunpack.c.l.b16 %v744
          %v778 = vunpack.c.l.b16 %v745
          %v779 = vunpack.c.l.b16 %v746
          %v780 = vunpack.c.l.b16 %v747
          %v781 = vunpack.c.l.b16 %v748
          %v782 = vunpack.c.l.b16 %v749
          %v783 = vunpack.c.l.b16 %v750
          %v784 = vunpack.c.l.b16 %v751
          %v785 = vunpack.c.l.b16 %v752
          %v786 = vpack.c.b16 %v771, %v770
          %v787 = vpack.c.b16 %v773, %v772
          %v788 = vpack.c.b16 %v775, %v774
          %v789 = vpack.c.b16 %v777, %v776
          %v790 = vpack.c.b16 %v779, %v778
          %v791 = vpack.c.b16 %v781, %v780
          %v792 = vpack.c.b16 %v783, %v782
          %v793 = vpack.c.b16 %v785, %v784
          %802 = vmatprep.subr.bf16.mxu0 0
          %803 = vmatpush1.bf16.msra.mxu0 %v786
          %804 = vmatprep.subr.bf16.mxu0 0
          %805 = vmatpush1.bf16.msra.mxu0 %v787
          %806 = vmatprep.subr.bf16.mxu0 0
          %807 = vmatpush1.bf16.msra.mxu0 %v788
          %808 = vmatprep.subr.bf16.mxu0 0
          %809 = vmatpush1.bf16.msra.mxu0 %v789
          %810 = vmatprep.subr.bf16.mxu0 0
          %811 = vmatpush1.bf16.msra.mxu0 %v790
          %812 = vmatprep.subr.bf16.mxu0 0
          %813 = vmatpush1.bf16.msra.mxu0 %v791
          %814 = vmatprep.subr.bf16.mxu0 0
          %815 = vmatpush1.bf16.msra.mxu0 %v792
          %816 = vmatprep.subr.bf16.mxu0 0
          %817 = vmatpush1.bf16.msra.mxu0 %v793
          %818 = vmatprep.subr.bf16.mxu0 0
          %819 = vmatpush1.bf16.msra.mxu0 0
          %820 = vmatprep.subr.bf16.mxu0 0
          %821 = vmatpush1.bf16.msra.mxu0 0
          %822 = vmatprep.subr.bf16.mxu0 0
          %823 = vmatpush1.bf16.msra.mxu0 0
          %824 = vmatprep.subr.bf16.mxu0 0
          %825 = vmatpush1.bf16.msra.mxu0 0
          %826 = vmatprep.subr.bf16.mxu0 0
          %827 = vmatpush1.bf16.msra.mxu0 0
          %828 = vmatprep.subr.bf16.mxu0 0
          %829 = vmatpush1.bf16.msra.mxu0 0
          %830 = vmatprep.subr.bf16.mxu0 0
          %831 = vmatpush1.bf16.msra.mxu0 0
          %832 = vmatprep.subr.bf16.mxu0 0
          %833 = vmatpush1.bf16.msra.mxu0 0
          %834 = vmatprep.mubr.bf16.mxu0 0
          %835 = vmatmul.mubr.bf16.gmra.mrb[0].mxu0 %v736
          %v836 = vpop.f32.mrb[0].mxu0
          %v837 = vadd.f32 %v753, %v836
          %v838 = vpop.f32.mrb[0].mxu0
          %v839 = vpop.f32.mrb[0].mxu0
          %v840 = vpop.f32.mrb[0].mxu0
          %841 = vdwg.mxu0
          %v842 = vmax.f32 %v837, 0.0
          %v843 = vpack.c.bf16 %v842, %v842
          %v844 = vld [vmem:[%s4] sm:$0xf]
          %v845 = vld [vmem:[%s4 + $0x4] sm:$0xf]
          %v846 = vld [vmem:[%s4 + $0x8] sm:$0xf]
          %v847 = vld [vmem:[%s4 + $0xc] sm:$0xf]
          %v848 = vld [vmem:[%s5] sm:$0x1]
          %v853 = vunpack.c.l.b16 %v844
          %v854 = vunpack.c.l.b16 %v845
          %v855 = vunpack.c.l.b16 %v846
          %v856 = vunpack.c.l.b16 %v847
          %v857 = vpack.c.b16 %v854, %v853
          %v858 = vpack.c.b16 %v856, %v855
          %v862 = vsel %vm448, %v843, 0
          %864 = vmatprep.subr.bf16.mxu0 0
          %865 = vmatpush1.bf16.msra.mxu0 %v857
          %866 = vmatprep.subr.bf16.mxu0 0
          %867 = vmatpush1.bf16.msra.mxu0 %v858
          %868 = vmatprep.subr.bf16.mxu0 0
          %869 = vmatpush1.bf16.msra.mxu0 0
          %870 = vmatprep.subr.bf16.mxu0 0
          %871 = vmatpush1.bf16.msra.mxu0 0
          %872 = vmatprep.subr.bf16.mxu0 0
          %873 = vmatpush1.bf16.msra.mxu0 0
          %874 = vmatprep.subr.bf16.mxu0 0
          %875 = vmatpush1.bf16.msra.mxu0 0
          %876 = vmatprep.subr.bf16.mxu0 0
          %877 = vmatpush1.bf16.msra.mxu0 0
          %878 = vmatprep.subr.bf16.mxu0 0
          %879 = vmatpush1.bf16.msra.mxu0 0
          %880 = vmatprep.subr.bf16.mxu0 0
          %881 = vmatpush1.bf16.msra.mxu0 0
          %882 = vmatprep.subr.bf16.mxu0 0
          %883 = vmatpush1.bf16.msra.mxu0 0
          %884 = vmatprep.subr.bf16.mxu0 0
          %885 = vmatpush1.bf16.msra.mxu0 0
          %886 = vmatprep.subr.bf16.mxu0 0
          %887 = vmatpush1.bf16.msra.mxu0 0
          %888 = vmatprep.subr.bf16.mxu0 0
          %889 = vmatpush1.bf16.msra.mxu0 0
          %890 = vmatprep.subr.bf16.mxu0 0
          %891 = vmatpush1.bf16.msra.mxu0 0
          %892 = vmatprep.subr.bf16.mxu0 0
          %893 = vmatpush1.bf16.msra.mxu0 0
          %894 = vmatprep.subr.bf16.mxu0 0
          %895 = vmatpush1.bf16.msra.mxu0 0
          %896 = vmatprep.mubr.bf16.mxu0 0
          %897 = vmatmul.mubr.bf16.gmra.mrb[0].mxu0 %v862
          %v898 = vpop.f32.mrb[0].mxu0
          %v899 = vadd.f32 %v848, %v898
          %v900 = vpop.f32.mrb[0].mxu0
          %v901 = vpop.f32.mrb[0].mxu0
          %v902 = vpop.f32.mrb[0].mxu0
          %903 = vdwg.mxu0
          %v904 = vand.u32 2147483647, %v899
          %v905 = vsub.f32 0.0, %v904
          %v906 = vmul.f32 %v905, 1.442695
          %v907 = vpow.pop %v906
          %vm908 = vcmp.ge.f32.partialorder %v899, 0.0
          %v909 = vadd.f32 %v907, 1.0
          %v910 = vrcp.pop %v909
          %v911 = vmul.f32 1.0, %v910
          %v912 = vmul.f32 %v907, %v910
          %v913 = vsel %vm908, %v911, %v912
          %vm914 = vcmask 122880
          %915 = vst.msk [vmem:[%s303] sm:$0x1] %vm914, %v913
        $region52: #{tpu_custom_call.1} parent=43 // pred_fallthru
          _
        %s916 = sand.u32 %s178, 1
        %s917 = scalar_lea.sflag [#allocation4], %s916
        %s918 = sand.u32 %s178, 1
        %s919 = scalar_lea.vmem [#allocation3], %s918
        %s920 = sand.u32 %s204, 1
        %s921 = scalar_lea.sflag [#allocation6], %s920
        %s922 = sand.u32 %s204, 1
        %s923 = scalar_lea.vmem [#allocation5], %s922
        // Predicated region
        $region53: #{tpu_custom_call.1} parent=43 // pred_check
          %p924 = pneg %p188
        $region54: #{tpu_custom_call.1} parent=43 // pred_check_branch
          %926 = sbr.rel (%p924) target = $region56
        $region55: #{tpu_custom_call.1} parent=43 // pred_region
          %s928 = ssub.s32 16, 16
          %929 = vsyncadd %s917, %s928
          %s930 = smul.addr %s29, 16
          %s931 = scalar_lea.hbm %s6, %s930
          %s933 = sshll.u32 %s919, 4
          %s934 = int_to_ptr.vmem [resolvable:$true] %s933
          %936 = dma.vmem_to_hbm [thread:$0]  %s934, 16, %s931, %s917
        $region56: #{tpu_custom_call.1} parent=43 // pred_fallthru
          _
        // Predicated region
        $region57: #{tpu_custom_call.1} parent=43 // pred_check
          %p937 = pneg %p214
        $region58: #{tpu_custom_call.1} parent=43 // pred_check_branch
          %939 = sbr.rel (%p937) target = $region60
        $region59: #{tpu_custom_call.1} parent=43 // pred_region
          %s941 = ssub.s32 16, 16
          %942 = vsyncadd %s921, %s941
          %s943 = smul.addr %s29, 16
          %s944 = scalar_lea.hbm %s7, %s943
          %s946 = sshll.u32 %s923, 4
          %s947 = int_to_ptr.vmem [resolvable:$true] %s946
          %949 = dma.vmem_to_hbm [thread:$0]  %s947, 16, %s944, %s921
        $region60: #{tpu_custom_call.1} parent=43 // pred_fallthru
          _
      $region44: #{tpu_custom_call.1} parent=5 // pred_fallthru
        _
      %p950 = scmp.le.s32.totalorder 2, %s20
      // Predicated region
      $region61: #{tpu_custom_call.1} parent=5 // pred_check
        %p951 = pneg %p950
      $region62: #{tpu_custom_call.1} parent=5 // pred_check_branch
        %953 = sbr.rel (%p951) target = $region64
      $region63: #{tpu_custom_call.1} parent=5 // pred_region
        %s954 = ssub.s32 %s20, 2
        // Predicated region
        $region65: #{tpu_custom_call.1} parent=63 // pred_check
          %p955 = pneg %p194
        $region66: #{tpu_custom_call.1} parent=63 // pred_check_branch
          %957 = sbr.rel (%p955) target = $region68
        $region67: #{tpu_custom_call.1} parent=63 // pred_region
          %s958 = sand.u32 %s179, 1
          %s959 = scalar_lea.sflag [#allocation4], %s958
          %s960 = sand.u32 %s179, 1
          %s961 = scalar_lea.vmem [#allocation3], %s960
          %962 = dma.done %s959, 16
        $region68: #{tpu_custom_call.1} parent=63 // pred_fallthru
          _
        // Predicated region
        $region69: #{tpu_custom_call.1} parent=63 // pred_check
          %p963 = pneg %p220
        $region70: #{tpu_custom_call.1} parent=63 // pred_check_branch
          %965 = sbr.rel (%p963) target = $region72
        $region71: #{tpu_custom_call.1} parent=63 // pred_region
          %s966 = sand.u32 %s205, 1
          %s967 = scalar_lea.sflag [#allocation6], %s966
          %s968 = sand.u32 %s205, 1
          %s969 = scalar_lea.vmem [#allocation5], %s968
          %970 = dma.done %s967, 16
        $region72: #{tpu_custom_call.1} parent=63 // pred_fallthru
          _
      $region64: #{tpu_custom_call.1} parent=5 // pred_fallthru
        _
    $region6: #{tpu_custom_call.1} parent=1 // loop_footer
      %s24 = sadd.s32 1, %s20
    $region7: #{tpu_custom_call.1} parent=1 // loop_footer_branch
      %19 = sbr.rel target = $region3
    $region8: #{tpu_custom_call.1} parent=1 // loop_exit
      _
    %971 = vsyncpa [#allocation4], 1
    %s972 = scalar_lea.sflag [#allocation4], 1
    %973 = vsyncpa %s972, 1
    %974 = vsyncpa [#allocation6], 1
    %s975 = scalar_lea.sflag [#allocation6], 1
    %976 = vsyncpa %s975, 1

</llo_original>
